<compile_context>
chip_gen: v6e
topology: v6e:2x2x1
jax: 0.10.0
libtpu: 0.0.40
codegen_flags: <defaults>
</compile_context>

<pallas_src>
import jax
import jax.numpy as jnp
from jax.experimental import pallas as pl
from jax.experimental.pallas import tpu as pltpu

LN_EPS = 1e-5  # PyTorch nn.LayerNorm default


def _layer_norm_f32(z, gamma, beta):
    mean = jnp.mean(z, axis=-1, keepdims=True)
    zc = z - mean
    var = jnp.mean(zc * zc, axis=-1, keepdims=True)
    zn = zc * jax.lax.rsqrt(var + LN_EPS)
    return zn * gamma + beta


def ffn_resident_kernel(x_ref, w1_ref, b1_ref, w2_ref, b2_ref, gamma_ref, beta_ref, o_ref):
    # x_ref: (TM, d_model); w1: (d_model, d_ff); w2: (d_ff, d_model); vectors are (1, *).
    x = x_ref[...]
    h = jnp.dot(x.astype(w1_ref.dtype), w1_ref[...], preferred_element_type=jnp.float32)
    h = jnp.maximum(h + b1_ref[...].astype(jnp.float32), 0.0)
    y = jnp.dot(h.astype(w2_ref.dtype), w2_ref[...], preferred_element_type=jnp.float32)
    y = y + b2_ref[...].astype(jnp.float32)
    # TODO(synk): dropout (applied after w_2 in the module) is identity here (eval mode);
    # training would draw a mask with pltpu.prng_seed / pltpu.prng_random_bits.
    z = y + x.astype(jnp.float32)  # residual
    out = _layer_norm_f32(z, gamma_ref[...].astype(jnp.float32),
                          beta_ref[...].astype(jnp.float32))
    o_ref[...] = out.astype(o_ref.dtype)


def ffn_dff_tiled_kernel(x_ref, w1_ref, b1_ref, w2_ref, b2_ref, gamma_ref, beta_ref,
                         o_ref, acc_ref):
    # Grid = (rows, d_ff tiles); acc_ref is a (TM, d_model) f32 accumulator in VMEM.
    k = pl.program_id(1)

    @pl.when(k == 0)
    def _():
        acc_ref[...] = jnp.zeros_like(acc_ref)

    x = x_ref[...]
    h = jnp.dot(x.astype(w1_ref.dtype), w1_ref[...], preferred_element_type=jnp.float32)
    h = jnp.maximum(h + b1_ref[...].astype(jnp.float32), 0.0)
    acc_ref[...] += jnp.dot(h.astype(w2_ref.dtype), w2_ref[...],
                            preferred_element_type=jnp.float32)

    @pl.when(k == pl.num_programs(1) - 1)
    def _():
        y = acc_ref[...] + b2_ref[...].astype(jnp.float32)
        # dropout identity (eval mode)
        z = y + x.astype(jnp.float32)
        out = _layer_norm_f32(z, gamma_ref[...].astype(jnp.float32),
                              beta_ref[...].astype(jnp.float32))
        o_ref[...] = out.astype(o_ref.dtype)


def positionwise_feed_forward(x, w1, b1, w2, b2, gamma, beta, *,
                              max_tm=512, tk_ff=None, compute_dtype=None):
    """x: (B, S, d_model); weights stored (in, out). Returns (B, S, d_model).

    compute_dtype: optional MXU operand dtype (e.g. jnp.bfloat16); residual/LN stay f32.
    tk_ff: force the d_ff-tiled path with this tile (multiple of 128 dividing d_ff).
    """
    B, S, d_model = x.shape
    d_ff = w1.shape[1]
    M = B * S

    if compute_dtype is not None:
        w1 = w1.astype(compute_dtype)
        w2 = w2.astype(compute_dtype)

    x2d = x.reshape(M, d_model)
    x_item = jnp.dtype(x.dtype).itemsize
    w_item = jnp.dtype(w1.dtype).itemsize
    b_item = jnp.dtype(b1.dtype).itemsize

    # Row tile: dtype-aware sublane packing multiple (f32: 8, bf16: 16, int8/fp8: 32).
    sub_mult = {4: 8, 2: 16, 1: 32}.get(x_item, 8)
    if M >= max_tm:
        tm = max_tm
    else:
        tm = max(sub_mult, ((M + sub_mult - 1) // sub_mult) * sub_mult)
    m_pad = pl.cdiv(M, tm) * tm
    if m_pad != M:
        # Zero-padded rows produce finite garbage (var+eps > 0) and are sliced off below.
        x2d = jnp.pad(x2d, ((0, m_pad - M), (0, 0)))
    grid_m = m_pad // tm

    # Generation-aware VMEM budget (~85% of physical, headroom for Mosaic scratch).
    try:
        vmem_cap = int(pltpu.get_tpu_info().vmem_capacity_bytes)
    except Exception:
        vmem_cap = 128 << 20
    vmem_budget = int(vmem_cap * 0.85)

    w_bytes = (w1.size + w2.size) * w_item
    const_bytes = (b1.size * b_item
                   + b2.size * jnp.dtype(b2.dtype).itemsize
                   + gamma.size * jnp.dtype(gamma.dtype).itemsize
                   + beta.size * jnp.dtype(beta.dtype).itemsize)
    stream_bytes = 4 * tm * d_model * x_item      # double-buffered x + out tiles
    ln_bytes = 3 * tm * d_model * 4               # LN temporaries
    slack = 4 << 20

    # Weight-resident path estimate (weights single-buffered via Buffered(1)).
    resident_est = (w_bytes + const_bytes + stream_bytes
                    + tm * d_ff * (4 + w_item) + ln_bytes + slack)

    def tiled_est(tk):
        return (2 * 2 * d_model * tk * w_item     # double-buffered w1/w2 k-tiles
                + 2 * tk * b_item                 # double-buffered b1 tile
                + const_bytes
                + stream_bytes
                + tm * d_model * 4                # f32 accumulator scratch
                + tm * tk * (4 + w_item)          # f32 h + cast copy
                + ln_bytes + slack)

    use_tiled = tk_ff is not None
    if not use_tiled and resident_est > vmem_budget and d_ff % 128 == 0:
        use_tiled = True
    if use_tiled and tk_ff is None:
        candidates = sorted((c for c in range(128, d_ff + 1, 128) if d_ff % c == 0),
                            reverse=True)
        tk_ff = candidates[-1]
        for c in candidates:
            if tiled_est(c) <= vmem_budget:
                tk_ff = c
                break
    # TODO(synk): if d_ff is not a multiple of 128 and the resident path overflows,
    # we still fall back to the resident path (spills) rather than padding d_ff.

    cost = pl.CostEstimate(
        flops=4 * m_pad * d_model * d_ff,
        transcendentals=m_pad,
        bytes_accessed=int(2 * m_pad * d_model * x_item
                           + (grid_m * w_bytes if use_tiled else w_bytes) + const_bytes),
    )

    if not use_tiled:
        grid_spec = pltpu.PrefetchScalarGridSpec(
            num_scalar_prefetch=0,
            grid=(grid_m,),
            in_specs=[
                pl.BlockSpec((tm, d_model), lambda i: (i, 0)),                 # x: row-tiled
                pl.BlockSpec((d_model, d_ff), lambda i: (0, 0),
                             pipeline_mode=pl.Buffered(1)),                    # w1: resident
                pl.BlockSpec((1, d_ff), lambda i: (0, 0),
                             pipeline_mode=pl.Buffered(1)),                    # b1
                pl.BlockSpec((d_ff, d_model), lambda i: (0, 0),
                             pipeline_mode=pl.Buffered(1)),                    # w2: resident
                pl.BlockSpec((1, d_model), lambda i: (0, 0),
                             pipeline_mode=pl.Buffered(1)),                    # b2
                pl.BlockSpec((1, d_model), lambda i: (0, 0),
                             pipeline_mode=pl.Buffered(1)),                    # gamma
                pl.BlockSpec((1, d_model), lambda i: (0, 0),
                             pipeline_mode=pl.Buffered(1)),                    # beta
            ],
            out_specs=pl.BlockSpec((tm, d_model), lambda i: (i, 0)),
        )
        kernel = ffn_resident_kernel
        dim_sem = ("parallel",)
    else:
        grid_k = d_ff // tk_ff
        grid_spec = pltpu.PrefetchScalarGridSpec(
            num_scalar_prefetch=0,
            grid=(grid_m, grid_k),
            in_specs=[
                pl.BlockSpec((tm, d_model), lambda i, k: (i, 0)),              # x (resident over k)
                pl.BlockSpec((d_model, tk_ff), lambda i, k: (0, k)),           # w1 column tile
                pl.BlockSpec((1, tk_ff), lambda i, k: (0, k)),                 # b1 tile
                pl.BlockSpec((tk_ff, d_model), lambda i, k: (k, 0)),           # w2 row tile
                pl.BlockSpec((1, d_model), lambda i, k: (0, 0),
                             pipeline_mode=pl.Buffered(1)),                    # b2
                pl.BlockSpec((1, d_model), lambda i, k: (0, 0),
                             pipeline_mode=pl.Buffered(1)),                    # gamma
                pl.BlockSpec((1, d_model), lambda i, k: (0, 0),
                             pipeline_mode=pl.Buffered(1)),                    # beta
            ],
            out_specs=pl.BlockSpec((tm, d_model), lambda i, k: (i, 0)),
            scratch_shapes=[pltpu.VMEM((tm, d_model), jnp.float32)],
        )
        kernel = ffn_dff_tiled_kernel
        dim_sem = ("parallel", "arbitrary")

    out2d = pl.pallas_call(
        kernel,
        out_shape=jax.ShapeDtypeStruct((m_pad, d_model), x.dtype),
        grid_spec=grid_spec,
        compiler_params=pltpu.CompilerParams(
            dimension_semantics=dim_sem,
            vmem_limit_bytes=vmem_budget,
        ),
        cost_estimate=cost,
    )(x2d, w1, b1, w2, b2, gamma, beta)

    return out2d[:M].reshape(B, S, d_model)


def _reference(x, w1, b1, w2, b2, gamma, beta):
    h = jnp.maximum(x @ w1 + b1[0], 0.0)
    y = h @ w2 + b2[0]
    z = y + x
    mean = jnp.mean(z, axis=-1, keepdims=True)
    var = jnp.mean((z - mean) ** 2, axis=-1, keepdims=True)
    zn = (z - mean) / jnp.sqrt(var + LN_EPS)
    return zn * gamma[0] + beta[0]


def _make_params(key, d_model, d_ff):
    kw1, kb1, kw2, kb2 = jax.random.split(key, 4)
    bound1 = 1.0 / (d_model ** 0.5)
    bound2 = 1.0 / (d_ff ** 0.5)
    w1 = jax.random.uniform(kw1, (d_model, d_ff), minval=-bound1, maxval=bound1, dtype=jnp.float32)
    b1 = jax.random.uniform(kb1, (1, d_ff), minval=-bound1, maxval=bound1, dtype=jnp.float32)
    w2 = jax.random.uniform(kw2, (d_ff, d_model), minval=-bound2, maxval=bound2, dtype=jnp.float32)
    b2 = jax.random.uniform(kb2, (1, d_model), minval=-bound2, maxval=bound2, dtype=jnp.float32)
    gamma = jnp.ones((1, d_model), dtype=jnp.float32)   # LayerNorm weight init
    beta = jnp.zeros((1, d_model), dtype=jnp.float32)   # LayerNorm bias init
    return w1, b1, w2, b2, gamma, beta


if __name__ == "__main__":
    key = jax.random.PRNGKey(0)
    k1, k2, k3, k4 = jax.random.split(key, 4)

    # 1) Small shapes consistent with the module's forward: weight-resident path.
    B, S, d_model, d_ff = 2, 8, 32, 64
    x = jax.random.normal(k1, (B, S, d_model), dtype=jnp.float32)
    params = _make_params(k2, d_model, d_ff)
    out = jax.block_until_ready(positionwise_feed_forward(x, *params))
    ref = _reference(x, *params)
    assert out.shape == (B, S, d_model)
    assert jnp.allclose(out, ref, atol=1e-4, rtol=1e-4)

    # 2) Force the d_ff-tiled accumulator path (exercises the v7x fallback).
    B2, S2, d_model2, d_ff2 = 2, 8, 128, 256
    x2 = jax.random.normal(k3, (B2, S2, d_model2), dtype=jnp.float32)
    params2 = _make_params(k4, d_model2, d_ff2)
    out2 = jax.block_until_ready(positionwise_feed_forward(x2, *params2, tk_ff=128))
    ref2 = _reference(x2, *params2)
    assert out2.shape == (B2, S2, d_model2)
    assert jnp.allclose(out2, ref2, atol=2e-3, rtol=2e-3)

    # 3) bf16 MXU operands (weights cast in wrapper, residual/LayerNorm stay f32).
    out3 = jax.block_until_ready(
        positionwise_feed_forward(x2, *params2, compute_dtype=jnp.bfloat16))
    assert jnp.all(jnp.isfinite(out3))
    assert jnp.allclose(out3, ref2, atol=1e-1, rtol=1e-1)

    print("KERNEL_OK")
</pallas_src>

<mosaic_0001>
module attributes {stable_mosaic.version = 11 : i64} {
  func.func @ffn_resident_kernel(%arg0: i32, %arg1: memref<16x32xf32, #tpu.memory_space<vmem>>, %arg2: memref<32x64xf32, #tpu.memory_space<vmem>>, %arg3: memref<1x64xf32, #tpu.memory_space<vmem>>, %arg4: memref<64x32xf32, #tpu.memory_space<vmem>>, %arg5: memref<1x32xf32, #tpu.memory_space<vmem>>, %arg6: memref<1x32xf32, #tpu.memory_space<vmem>>, %arg7: memref<1x32xf32, #tpu.memory_space<vmem>>, %arg8: memref<16x32xf32, #tpu.memory_space<vmem>>) attributes {dimension_semantics = [#tpu.dimension_semantics<parallel>], iteration_bounds = array<i64: 1>, scalar_prefetch = 0 : i64, scratch_operands = 0 : i64, tpu.core_type = #tpu.core_type<tc>, window_params = [{transform_indices = @transform_0, window_bounds = array<i64: 16, 32>}, {pipeline_mode = #tpu.pipeline_mode<synchronous>, transform_indices = @transform_1, window_bounds = array<i64: 32, 64>}, {pipeline_mode = #tpu.pipeline_mode<synchronous>, transform_indices = @transform_2, window_bounds = array<i64: 1, 64>}, {pipeline_mode = #tpu.pipeline_mode<synchronous>, transform_indices = @transform_3, window_bounds = array<i64: 64, 32>}, {pipeline_mode = #tpu.pipeline_mode<synchronous>, transform_indices = @transform_4, window_bounds = array<i64: 1, 32>}, {pipeline_mode = #tpu.pipeline_mode<synchronous>, transform_indices = @transform_5, window_bounds = array<i64: 1, 32>}, {pipeline_mode = #tpu.pipeline_mode<synchronous>, transform_indices = @transform_6, window_bounds = array<i64: 1, 32>}, {transform_indices = @transform_7, window_bounds = array<i64: 16, 32>}]} {
    %c0 = arith.constant 0 : index
    %c0_0 = arith.constant 0 : index
    %0 = vector.load %arg1[%c0, %c0_0] : memref<16x32xf32, #tpu.memory_space<vmem>>, vector<16x32xf32>
    %c0_1 = arith.constant 0 : index
    %c0_2 = arith.constant 0 : index
    %1 = vector.load %arg2[%c0_1, %c0_2] : memref<32x64xf32, #tpu.memory_space<vmem>>, vector<32x64xf32>
    %cst = arith.constant dense<0.000000e+00> : vector<16x64xf32>
    %2 = tpu.matmul %0, %1, %cst {dimension_numbers = #tpu.dot_dimension_numbers<[1], [0], [0], [1], [0, 0, 1, 1], [], []>} : vector<16x32xf32>, vector<32x64xf32>, vector<16x64xf32> -> vector<16x64xf32>
    %c0_3 = arith.constant 0 : index
    %c0_4 = arith.constant 0 : index
    %3 = vector.load %arg3[%c0_3, %c0_4] : memref<1x64xf32, #tpu.memory_space<vmem>>, vector<1x64xf32>
    %4 = vector.broadcast %3 : vector<1x64xf32> to vector<16x64xf32>
    %5 = arith.addf %2, %4 : vector<16x64xf32>
    %cst_5 = arith.constant 0.000000e+00 : f32
    %6 = vector.broadcast %cst_5 : f32 to vector<16x64xf32>
    %7 = arith.maximumf %5, %6 : vector<16x64xf32>
    %c0_6 = arith.constant 0 : index
    %c0_7 = arith.constant 0 : index
    %8 = vector.load %arg4[%c0_6, %c0_7] : memref<64x32xf32, #tpu.memory_space<vmem>>, vector<64x32xf32>
    %cst_8 = arith.constant dense<0.000000e+00> : vector<16x32xf32>
    %9 = tpu.matmul %7, %8, %cst_8 {dimension_numbers = #tpu.dot_dimension_numbers<[1], [0], [0], [1], [0, 0, 1, 1], [], []>} : vector<16x64xf32>, vector<64x32xf32>, vector<16x32xf32> -> vector<16x32xf32>
    %c0_9 = arith.constant 0 : index
    %c0_10 = arith.constant 0 : index
    %10 = vector.load %arg5[%c0_9, %c0_10] : memref<1x32xf32, #tpu.memory_space<vmem>>, vector<1x32xf32>
    %11 = vector.broadcast %10 : vector<1x32xf32> to vector<16x32xf32>
    %12 = arith.addf %9, %11 : vector<16x32xf32>
    %13 = arith.addf %12, %0 : vector<16x32xf32>
    %c0_11 = arith.constant 0 : index
    %c0_12 = arith.constant 0 : index
    %14 = vector.load %arg6[%c0_11, %c0_12] : memref<1x32xf32, #tpu.memory_space<vmem>>, vector<1x32xf32>
    %c0_13 = arith.constant 0 : index
    %c0_14 = arith.constant 0 : index
    %15 = vector.load %arg7[%c0_13, %c0_14] : memref<1x32xf32, #tpu.memory_space<vmem>>, vector<1x32xf32>
    %cst_15 = arith.constant dense<0.000000e+00> : vector<16xf32>
    %16 = vector.multi_reduction <add>, %13, %cst_15 [1] : vector<16x32xf32> to vector<16xf32>
    %17 = vector.shape_cast %16 : vector<16xf32> to vector<16x1xf32>
    %cst_16 = arith.constant 3.200000e+01 : f32
    %18 = vector.broadcast %cst_16 : f32 to vector<16x1xf32>
    %19 = arith.divf %17, %18 : vector<16x1xf32>
    %20 = vector.broadcast %19 : vector<16x1xf32> to vector<16x32xf32>
    %21 = arith.subf %13, %20 : vector<16x32xf32>
    %22 = arith.mulf %21, %21 : vector<16x32xf32>
    %cst_17 = arith.constant dense<0.000000e+00> : vector<16xf32>
    %23 = vector.multi_reduction <add>, %22, %cst_17 [1] : vector<16x32xf32> to vector<16xf32>
    %24 = vector.shape_cast %23 : vector<16xf32> to vector<16x1xf32>
    %cst_18 = arith.constant 3.200000e+01 : f32
    %25 = vector.broadcast %cst_18 : f32 to vector<16x1xf32>
    %26 = arith.divf %24, %25 : vector<16x1xf32>
    %cst_19 = arith.constant 9.99999974E-6 : f32
    %27 = vector.broadcast %cst_19 : f32 to vector<16x1xf32>
    %28 = arith.addf %26, %27 : vector<16x1xf32>
    %29 = math.rsqrt %28 : vector<16x1xf32>
    %30 = vector.broadcast %29 : vector<16x1xf32> to vector<16x32xf32>
    %31 = arith.mulf %21, %30 : vector<16x32xf32>
    %32 = vector.broadcast %14 : vector<1x32xf32> to vector<16x32xf32>
    %33 = arith.mulf %31, %32 : vector<16x32xf32>
    %34 = vector.broadcast %15 : vector<1x32xf32> to vector<16x32xf32>
    %35 = arith.addf %33, %34 : vector<16x32xf32>
    %c0_20 = arith.constant 0 : index
    %c0_21 = arith.constant 0 : index
    %36 = vector.load %arg8[%c0_20, %c0_21] : memref<16x32xf32, #tpu.memory_space<vmem>>, vector<16x32xf32>
    tpu.vector_store %arg8[%c0_20, %c0_21], %35 {strides = array<i32>} : memref<16x32xf32, #tpu.memory_space<vmem>>, vector<16x32xf32>,
    return
  }
  func.func @transform_0(%arg0: i32) -> (i32, i32) {
    %c0_i32 = arith.constant 0 : i32
    %c0_i32_0 = arith.constant 0 : i32
    return %arg0, %c0_i32 : i32, i32
  }
  func.func @transform_1(%arg0: i32) -> (i32, i32) {
    %c0_i32 = arith.constant 0 : i32
    %c0_i32_0 = arith.constant 0 : i32
    %c0_i32_1 = arith.constant 0 : i32
    return %c0_i32, %c0_i32_0 : i32, i32
  }
  func.func @transform_2(%arg0: i32) -> (i32, i32) {
    %c0_i32 = arith.constant 0 : i32
    %c0_i32_0 = arith.constant 0 : i32
    %c0_i32_1 = arith.constant 0 : i32
    return %c0_i32, %c0_i32_0 : i32, i32
  }
  func.func @transform_3(%arg0: i32) -> (i32, i32) {
    %c0_i32 = arith.constant 0 : i32
    %c0_i32_0 = arith.constant 0 : i32
    %c0_i32_1 = arith.constant 0 : i32
    return %c0_i32, %c0_i32_0 : i32, i32
  }
  func.func @transform_4(%arg0: i32) -> (i32, i32) {
    %c0_i32 = arith.constant 0 : i32
    %c0_i32_0 = arith.constant 0 : i32
    %c0_i32_1 = arith.constant 0 : i32
    return %c0_i32, %c0_i32_0 : i32, i32
  }
  func.func @transform_5(%arg0: i32) -> (i32, i32) {
    %c0_i32 = arith.constant 0 : i32
    %c0_i32_0 = arith.constant 0 : i32
    %c0_i32_1 = arith.constant 0 : i32
    return %c0_i32, %c0_i32_0 : i32, i32
  }
  func.func @transform_6(%arg0: i32) -> (i32, i32) {
    %c0_i32 = arith.constant 0 : i32
    %c0_i32_0 = arith.constant 0 : i32
    %c0_i32_1 = arith.constant 0 : i32
    return %c0_i32, %c0_i32_0 : i32, i32
  }
  func.func @transform_7(%arg0: i32) -> (i32, i32) {
    %c0_i32 = arith.constant 0 : i32
    %c0_i32_0 = arith.constant 0 : i32
    return %arg0, %c0_i32 : i32, i32
  }
}

</mosaic_0001>

<llo_original>
// kernel: tpu_custom_call.1
$region0: #{tpu_custom_call.1}
  #allocation0 [shape = 'u32[]', space=smem, size = 0x4, offset = 0x4, fixed_abs, tag = 'smem constant byte address 0x4 - core index']
  #allocation1 [shape = 'u32[144,128]{1,0:T(1,128)}', space=vmem, size = 0x12000, scoped, tag = 'internal scratch']
  %s0 = inlined_call_operand.vmem [shape: f32[16,32], index: 0, kind: input, shape index: {}]
  %s1 = inlined_call_operand.vmem [shape: f32[32,64], index: 1, kind: input, shape index: {}]
  %s2 = inlined_call_operand.vmem [shape: f32[1,64], index: 2, kind: input, shape index: {}]
  %s3 = inlined_call_operand.vmem [shape: f32[64,32], index: 3, kind: input, shape index: {}]
  %s4 = inlined_call_operand.vmem [shape: f32[1,32], index: 4, kind: input, shape index: {}]
  %s5 = inlined_call_operand.vmem [shape: f32[1,32], index: 5, kind: input, shape index: {}]
  %s6 = inlined_call_operand.vmem [shape: f32[1,32], index: 6, kind: input, shape index: {}]
  %s7 = inlined_call_operand.hbm [shape: f32[16,32], index: 7, kind: output, shape index: {}]
  %s8 = sld [smem:[#allocation0]]
  $region38: #{tpu_custom_call.1} parent=0
    _
  %s10 = ssub.s32 1, %s8
  %s11 = scalar_select 0, %s10, %s8
  $region1: #{tpu_custom_call.1} parent=0
    #allocation2 [shape = 'u8[8192]{0}', space=vmem, size = 0x2000, scoped, tag = 'output window, operand 0, single buffered']
    #allocation3 [shape = 's32[1]{0}', space=sflag, size = 0x4, scoped, tag = 'scoped memory for tpu_custom_call.1']
    %12 = vsyncpa [#allocation3], 0
    // Predicated region
    $region2: #{tpu_custom_call.1} parent=1 // pred_check
      _
    $region3: #{tpu_custom_call.1} parent=1 // pred_check_branch
      %14 = sbr.rel (0) target = $region5
    $region4: #{tpu_custom_call.1} parent=1 // pred_region
      _
    $region5: #{tpu_custom_call.1} parent=1 // pred_fallthru
      _
    // Predicated region
    $region6: #{tpu_custom_call.1} parent=1 // pred_check
      _
    $region7: #{tpu_custom_call.1} parent=1 // pred_check_branch
      %16 = sbr.rel (0) target = $region9
    $region8: #{tpu_custom_call.1} parent=1 // pred_region
      _
    $region9: #{tpu_custom_call.1} parent=1 // pred_fallthru
      _
    // Predicated region
    $region10: #{tpu_custom_call.1} parent=1 // pred_check
      _
    $region11: #{tpu_custom_call.1} parent=1 // pred_check_branch
      %18 = sbr.rel (0) target = $region13
    $region12: #{tpu_custom_call.1} parent=1 // pred_region
      _
    $region13: #{tpu_custom_call.1} parent=1 // pred_fallthru
      _
    // Predicated region
    $region14: #{tpu_custom_call.1} parent=1 // pred_check
      _
    $region15: #{tpu_custom_call.1} parent=1 // pred_check_branch
      %20 = sbr.rel (0) target = $region17
    $region16: #{tpu_custom_call.1} parent=1 // pred_region
      _
    $region17: #{tpu_custom_call.1} parent=1 // pred_fallthru
      _
    // Predicated region
    $region18: #{tpu_custom_call.1} parent=1 // pred_check
      _
    $region19: #{tpu_custom_call.1} parent=1 // pred_check_branch
      %22 = sbr.rel (0) target = $region21
    $region20: #{tpu_custom_call.1} parent=1 // pred_region
      _
    $region21: #{tpu_custom_call.1} parent=1 // pred_fallthru
      _
    // Predicated region
    $region22: #{tpu_custom_call.1} parent=1 // pred_check
      _
    $region23: #{tpu_custom_call.1} parent=1 // pred_check_branch
      %24 = sbr.rel (0) target = $region25
    $region24: #{tpu_custom_call.1} parent=1 // pred_region
      _
    $region25: #{tpu_custom_call.1} parent=1 // pred_fallthru
      _
    // Predicated region
    $region26: #{tpu_custom_call.1} parent=1 // pred_check
      _
    $region27: #{tpu_custom_call.1} parent=1 // pred_check_branch
      %26 = sbr.rel (0) target = $region29
    $region28: #{tpu_custom_call.1} parent=1 // pred_region
      _
    $region29: #{tpu_custom_call.1} parent=1 // pred_fallthru
      _
    %v27 = vld [vmem:[%s0] sm:$0xff]
    %v28 = vld [vmem:[%s0 + $0x8] sm:$0xff]
    %v29 = vld [vmem:[%s1] sm:$0xff]
    %v30 = vld [vmem:[%s1 + $0x8] sm:$0xff]
    %v31 = vld [vmem:[%s1 + $0x10] sm:$0xff]
    %v32 = vld [vmem:[%s1 + $0x18] sm:$0xff]
    %v33 = vld [vmem:[%s2] sm:$0x1]
    %v35 = vlaneseq
    %v36 = vshrl.u32 %v35, 7
    %v37 = vsub.s32 0, %v36
    %v38 = vrot.slane %v33, %v37
    %vm40 = vcmask 261120
    %v42 = vsel %vm40, %v27, 0
    %v45 = vsel %vm40, %v28, 0
    %47 = vmatprep.subr.mxu0 0.0
    %48 = vmatpush1.msra.mxu0 0.0
    %49 = vmatprep.subr.mxu0 0.0
    %50 = vmatpush1.msra.mxu0 0.0
    %51 = vmatprep.subr.mxu0 0.0
    %52 = vmatpush1.msra.mxu0 0.0
    %53 = vmatprep.subr.mxu0 0.0
    %54 = vmatpush1.msra.mxu0 0.0
    %55 = vmatprep.subr.mxu0 0.0
    %56 = vmatpush1.msra.mxu0 0.0
    %57 = vmatprep.subr.mxu0 0.0
    %58 = vmatpush1.msra.mxu0 0.0
    %59 = vmatprep.subr.mxu0 0.0
    %60 = vmatpush1.msra.mxu0 0.0
    %61 = vmatprep.subr.mxu0 0.0
    %62 = vmatpush1.msra.mxu0 0.0
    %63 = vmatprep.subr.mxu0 0.0
    %64 = vmatpush1.msra.mxu0 0.0
    %65 = vmatprep.subr.mxu0 0.0
    %66 = vmatpush1.msra.mxu0 0.0
    %67 = vmatprep.subr.mxu0 0.0
    %68 = vmatpush1.msra.mxu0 0.0
    %69 = vmatprep.subr.mxu0 0.0
    %70 = vmatpush1.msra.mxu0 0.0
    %71 = vmatprep.subr.mxu0 0.0
    %72 = vmatpush1.msra.mxu0 %v32
    %73 = vmatprep.subr.mxu0 0.0
    %74 = vmatpush1.msra.mxu0 %v31
    %75 = vmatprep.subr.mxu0 0.0
    %76 = vmatpush1.msra.mxu0 %v30
    %77 = vmatprep.subr.mxu0 0.0
    %78 = vmatpush1.msra.mxu0 %v29
    %79 = vmatprep.subr.mxu0 0.0
    %80 = vmatpush2.msra.mxu0 0.0
    %81 = vmatprep.subr.mxu0 0.0
    %82 = vmatpush2.msra.mxu0 0.0
    %83 = vmatprep.subr.mxu0 0.0
    %84 = vmatpush2.msra.mxu0 0.0
    %85 = vmatprep.subr.mxu0 0.0
    %86 = vmatpush2.msra.mxu0 0.0
    %87 = vmatprep.subr.mxu0 0.0
    %88 = vmatpush2.msra.mxu0 0.0
    %89 = vmatprep.subr.mxu0 0.0
    %90 = vmatpush2.msra.mxu0 0.0
    %91 = vmatprep.subr.mxu0 0.0
    %92 = vmatpush2.msra.mxu0 0.0
    %93 = vmatprep.subr.mxu0 0.0
    %94 = vmatpush2.msra.mxu0 0.0
    %95 = vmatprep.subr.mxu0 0.0
    %96 = vmatpush2.msra.mxu0 0.0
    %97 = vmatprep.subr.mxu0 0.0
    %98 = vmatpush2.msra.mxu0 0.0
    %99 = vmatprep.subr.mxu0 0.0
    %100 = vmatpush2.msra.mxu0 0.0
    %101 = vmatprep.subr.mxu0 0.0
    %102 = vmatpush2.msra.mxu0 0.0
    %103 = vmatprep.subr.mxu0 0.0
    %104 = vmatpush2.msra.mxu0 0.0
    %105 = vmatprep.subr.mxu0 0.0
    %106 = vmatpush2.msra.mxu0 0.0
    %107 = vmatprep.subr.mxu0 0.0
    %108 = vmatpush2.msra.mxu0 0.0
    %109 = vmatprep.subr.mxu0 0.0
    %110 = vmatpush2.msra.mxu0 0.0
    %111 = vmatprep.mubr.f32.mxu0 0.0
    %112 = vmatmul.mubr.f32.gmra.mxu0 %v42
    %v113 = vpop.f32.mrf.mxu0
    %v114 = vadd.f32 %v38, %v113
    %v115 = vpop.f32.mrf.mxu0
    %116 = vmatprep.mubr.f32.mxu0 0.0
    %117 = vmatmul.mubr.f32.gmra.mxu0 %v45
    %v118 = vpop.f32.mrf.mxu0
    %v119 = vadd.f32 %v38, %v118
    %v120 = vpop.f32.mrf.mxu0
    %121 = vdwg.mxu0
    %v122 = vmax.f32 %v114, 0.0
    %v123 = vmax.f32 %v119, 0.0
    %v124 = vld [vmem:[%s3] sm:$0xff]
    %v125 = vld [vmem:[%s3 + $0x8] sm:$0xff]
    %v126 = vld [vmem:[%s3 + $0x10] sm:$0xff]
    %v127 = vld [vmem:[%s3 + $0x18] sm:$0xff]
    %v128 = vld [vmem:[%s3 + $0x20] sm:$0xff]
    %v129 = vld [vmem:[%s3 + $0x28] sm:$0xff]
    %v130 = vld [vmem:[%s3 + $0x30] sm:$0xff]
    %v131 = vld [vmem:[%s3 + $0x38] sm:$0xff]
    %v132 = vld [vmem:[%s4] sm:$0x1]
    %v134 = vlaneseq
    %v135 = vshrl.u32 %v134, 7
    %v136 = vsub.s32 0, %v135
    %v137 = vrot.slane %v132, %v136
    %vm139 = vcmask 523264
    %v141 = vsel %vm139, %v122, 0
    %v144 = vsel %vm139, %v123, 0
    %146 = vmatprep.subr.mxu0 0.0
    %147 = vmatpush1.msra.mxu0 0.0
    %148 = vmatprep.subr.mxu0 0.0
    %149 = vmatpush1.msra.mxu0 0.0
    %150 = vmatprep.subr.mxu0 0.0
    %151 = vmatpush1.msra.mxu0 0.0
    %152 = vmatprep.subr.mxu0 0.0
    %153 = vmatpush1.msra.mxu0 0.0
    %154 = vmatprep.subr.mxu0 0.0
    %155 = vmatpush1.msra.mxu0 0.0
    %156 = vmatprep.subr.mxu0 0.0
    %157 = vmatpush1.msra.mxu0 0.0
    %158 = vmatprep.subr.mxu0 0.0
    %159 = vmatpush1.msra.mxu0 0.0
    %160 = vmatprep.subr.mxu0 0.0
    %161 = vmatpush1.msra.mxu0 0.0
    %162 = vmatprep.subr.mxu0 0.0
    %163 = vmatpush1.msra.mxu0 %v131
    %164 = vmatprep.subr.mxu0 0.0
    %165 = vmatpush1.msra.mxu0 %v130
    %166 = vmatprep.subr.mxu0 0.0
    %167 = vmatpush1.msra.mxu0 %v129
    %168 = vmatprep.subr.mxu0 0.0
    %169 = vmatpush1.msra.mxu0 %v128
    %170 = vmatprep.subr.mxu0 0.0
    %171 = vmatpush1.msra.mxu0 %v127
    %172 = vmatprep.subr.mxu0 0.0
    %173 = vmatpush1.msra.mxu0 %v126
    %174 = vmatprep.subr.mxu0 0.0
    %175 = vmatpush1.msra.mxu0 %v125
    %176 = vmatprep.subr.mxu0 0.0
    %177 = vmatpush1.msra.mxu0 %v124
    %178 = vmatprep.subr.mxu0 0.0
    %179 = vmatpush2.msra.mxu0 0.0
    %180 = vmatprep.subr.mxu0 0.0
    %181 = vmatpush2.msra.mxu0 0.0
    %182 = vmatprep.subr.mxu0 0.0
    %183 = vmatpush2.msra.mxu0 0.0
    %184 = vmatprep.subr.mxu0 0.0
    %185 = vmatpush2.msra.mxu0 0.0
    %186 = vmatprep.subr.mxu0 0.0
    %187 = vmatpush2.msra.mxu0 0.0
    %188 = vmatprep.subr.mxu0 0.0
    %189 = vmatpush2.msra.mxu0 0.0
    %190 = vmatprep.subr.mxu0 0.0
    %191 = vmatpush2.msra.mxu0 0.0
    %192 = vmatprep.subr.mxu0 0.0
    %193 = vmatpush2.msra.mxu0 0.0
    %194 = vmatprep.subr.mxu0 0.0
    %195 = vmatpush2.msra.mxu0 0.0
    %196 = vmatprep.subr.mxu0 0.0
    %197 = vmatpush2.msra.mxu0 0.0
    %198 = vmatprep.subr.mxu0 0.0
    %199 = vmatpush2.msra.mxu0 0.0
    %200 = vmatprep.subr.mxu0 0.0
    %201 = vmatpush2.msra.mxu0 0.0
    %202 = vmatprep.subr.mxu0 0.0
    %203 = vmatpush2.msra.mxu0 0.0
    %204 = vmatprep.subr.mxu0 0.0
    %205 = vmatpush2.msra.mxu0 0.0
    %206 = vmatprep.subr.mxu0 0.0
    %207 = vmatpush2.msra.mxu0 0.0
    %208 = vmatprep.subr.mxu0 0.0
    %209 = vmatpush2.msra.mxu0 0.0
    %210 = vmatprep.mubr.f32.mxu0 0.0
    %211 = vmatmul.mubr.f32.gmra.mxu0 %v141
    %v212 = vpop.f32.mrf.mxu0
    %v213 = vadd.f32 %v137, %v212
    %v214 = vpop.f32.mrf.mxu0
    %215 = vmatprep.mubr.f32.mxu0 0.0
    %216 = vmatmul.mubr.f32.gmra.mxu0 %v144
    %v217 = vpop.f32.mrf.mxu0
    %v218 = vadd.f32 %v137, %v217
    %v219 = vpop.f32.mrf.mxu0
    %220 = vdwg.mxu0
    %v221 = vadd.f32 %v213, %v27
    %v222 = vadd.f32 %v218, %v28
    %v223 = vld [vmem:[%s5] sm:$0x1]
    %v224 = vld [vmem:[%s6] sm:$0x1]
    %v225 = vsel %vm40, %v221, 0.0
    %226 = vadd.xlane.f32.xlu0 %v225
    %v227 = vpop.xlane.xlu0 %226
    %v228 = vsel %vm40, %v222, 0.0
    %229 = vadd.xlane.f32.xlu0 %v228
    %v230 = vpop.xlane.xlu0 %229
    %v231 = vrcp.pop 32.0
    %v232 = vmul.f32 %v227, %v231
    %v233 = vmul.f32 %v230, %v231
    %v234 = vsub.f32 %v221, %v232
    %v235 = vsub.f32 %v222, %v233
    %v236 = vmul.f32 %v234, %v234
    %v237 = vmul.f32 %v235, %v235
    %v238 = vsel %vm40, %v236, 0.0
    %239 = vadd.xlane.f32.xlu0 %v238
    %v240 = vpop.xlane.xlu0 %239
    %v241 = vsel %vm40, %v237, 0.0
    %242 = vadd.xlane.f32.xlu0 %v241
    %v243 = vpop.xlane.xlu0 %242
    %v244 = vmul.f32 %v240, %v231
    %v245 = vmul.f32 %v243, %v231
    %v246 = vadd.f32 %v244, 1e-05
    %v247 = vadd.f32 %v245, 1e-05
    %v248 = vrsqrt.pop %v246
    %v249 = vrsqrt.pop %v247
    %v250 = vmul.f32 %v234, %v248
    %v251 = vmul.f32 %v235, %v249
    %v253 = vlaneseq
    %v254 = vshrl.u32 %v253, 7
    %v255 = vsub.s32 0, %v254
    %v256 = vrot.slane %v223, %v255
    %v258 = vmul.f32 %v250, %v256
    %v259 = vmul.f32 %v251, %v256
    %v261 = vlaneseq
    %v262 = vshrl.u32 %v261, 7
    %v263 = vsub.s32 0, %v262
    %v264 = vrot.slane %v224, %v263
    %v266 = vadd.f32 %v258, %v264
    %v267 = vadd.f32 %v259, %v264
    %268 = vst.msk [vmem:[#allocation2] sm:$0xff] %vm40, %v266
    %269 = vst.msk [vmem:[#allocation2 + $0x8] sm:$0xff] %vm40, %v267
    // Predicated region
    $region30: #{tpu_custom_call.1} parent=1 // pred_check
      _
    $region31: #{tpu_custom_call.1} parent=1 // pred_check_branch
      %271 = sbr.rel (0) target = $region33
    $region32: #{tpu_custom_call.1} parent=1 // pred_region
      %s273 = ssub.s32 256, 256
      %274 = vsyncadd [#allocation3], %s273
      %s275 = sshll.u32 [#allocation2], 4
      %s276 = int_to_ptr.vmem [resolvable:$true] %s275
      %281 = dma.vmem_to_hbm [thread:$0]  %s276, 256, %s7, [#allocation3], 128, 128, 8
    $region33: #{tpu_custom_call.1} parent=1 // pred_fallthru
      _
    // Predicated region
    $region34: #{tpu_custom_call.1} parent=1 // pred_check
      _
    $region35: #{tpu_custom_call.1} parent=1 // pred_check_branch
      %283 = sbr.rel (0) target = $region37
    $region36: #{tpu_custom_call.1} parent=1 // pred_region
      %284 = dma.done [#allocation3], 256
    $region37: #{tpu_custom_call.1} parent=1 // pred_fallthru
      _
    %285 = vsyncpa [#allocation3], 1

</llo_original>
